<compile_context>
chip_gen: v6e
topology: v6e:2x2x1
jax: 0.10.0
libtpu: 0.0.40
codegen_flags: <defaults>
</compile_context>

<pallas_src>
import functools

import jax
import jax.numpy as jnp
from jax import lax
from jax.experimental import pallas as pl
from jax.experimental.pallas import tpu as pltpu

EPS = 1e-5
# Lane padding on each side of the flattened H*W plane.  Must be >= W + 1 so
# every 3x3 tap shift stays inside the buffer; 128 keeps every staging store
# lane-aligned (unmasked full-vreg stores).
PAD = 128


def _conv3x3_im2col(pad_ref, w_ref, left_ok, right_ok, height, width):
    """3x3 stride-1 'SAME' convolution as one im2col matmul per image.

    pad_ref: (N, Cin, PAD + H*W + PAD) f32 staging buffer; the PAD regions are
             zero, so vertical tap shifts read zeros at the top/bottom border.
    w_ref:   (Cout, 9*Cin) bf16 weight, rows ordered (ky, kx, cin).
    left_ok/right_ok: (1, 1, H*W) bool masks zeroing the taps that would
             otherwise wrap across image rows at the left/right border.
    Returns  (N, Cout, H*W) f32.
    """
    n, cin = pad_ref.shape[0], pad_ref.shape[1]
    hw = height * width

    taps = []
    for ky in range(3):
        for kx in range(3):
            start = PAD + (ky - 1) * width + (kx - 1)
            tap = pad_ref[:, :, start:start + hw]            # (N, Cin, HW)
            if kx == 0:
                tap = jnp.where(left_ok, tap, 0.0)
            elif kx == 2:
                tap = jnp.where(right_ok, tap, 0.0)
            taps.append(tap)
    patches = jnp.stack(taps, axis=0)                        # (9, N, Cin, HW)

    w_mat = w_ref[...]                                       # (Cout, 9*Cin) bf16
    outs = []
    for i in range(n):
        p_i = patches[:, i].reshape(9 * cin, hw).astype(jnp.bfloat16)
        outs.append(jnp.dot(w_mat, p_i, preferred_element_type=jnp.float32))
    return jnp.stack(outs, axis=0)                           # (N, Cout, HW) f32


def _batchnorm_relu(acc, gamma, beta, inv_count):
    """Training-mode BatchNorm (single-pass stats) + ReLU on (N, C, HW) f32."""
    s = jnp.sum(jnp.sum(acc, axis=2, keepdims=True), axis=0, keepdims=True)
    ss = jnp.sum(jnp.sum(acc * acc, axis=2, keepdims=True), axis=0, keepdims=True)
    mean = s * inv_count
    var = ss * inv_count - mean * mean                       # biased variance
    scale = gamma * lax.rsqrt(var + EPS)                     # (1, C, 1)
    shift = beta - mean * scale                              # (1, C, 1)
    return jnp.maximum(acc * scale + shift, 0.0)


def _vgg_block_kernel(x_ref, w1_ref, g1_ref, be1_ref, w2_ref, g2_ref, be2_ref,
                      out_ref, xpad_ref, h1pad_ref, *, height, width):
    # x_ref   : (N, Cin, H*W)  f32   NCHW input, spatial flattened on lanes
    # w?_ref  : (C_out, 9*C_in) bf16 im2col conv weight
    # g?/be?  : (1, C, 1)      f32   BN affine parameters
    # out_ref : (N, Cout, H*W) f32   lane-dense output
    # xpad_ref/h1pad_ref: (N, C, PAD + H*W + PAD) f32 zero-bordered staging
    n, cin, hw = x_ref.shape
    cm = w1_ref.shape[0]
    inv_count = 1.0 / float(n * hw)

    # Column-position masks for the left/right image border.
    col = lax.broadcasted_iota(jnp.int32, (1, 1, hw), 2)
    if width & (width - 1) == 0:
        xcol = jnp.bitwise_and(col, width - 1)
    else:
        xcol = lax.rem(col, width)
    left_ok = xcol != 0
    right_ok = xcol != (width - 1)

    # ---- stage zero-padded input (border strips only; aligned stores) ------
    zpad1 = jnp.zeros((n, cin, PAD), jnp.float32)
    xpad_ref[:, :, 0:PAD] = zpad1
    xpad_ref[:, :, PAD + hw:PAD + hw + PAD] = zpad1
    xpad_ref[:, :, PAD:PAD + hw] = x_ref[...]

    # ---- conv1 (one bf16 im2col matmul per image) + BN1 + ReLU --------------
    acc1 = _conv3x3_im2col(xpad_ref, w1_ref, left_ok, right_ok, height, width)
    # (conv bias omitted: training-mode BN mean subtraction cancels it exactly)
    y1 = _batchnorm_relu(acc1, g1_ref[...], be1_ref[...], inv_count)

    # ---- stage intermediate for conv2 (border strips only) ------------------
    zpad2 = jnp.zeros((n, cm, PAD), jnp.float32)
    h1pad_ref[:, :, 0:PAD] = zpad2
    h1pad_ref[:, :, PAD + hw:PAD + hw + PAD] = zpad2
    h1pad_ref[:, :, PAD:PAD + hw] = y1

    # ---- conv2 + BN2 + ReLU -> lane-dense output store -----------------------
    acc2 = _conv3x3_im2col(h1pad_ref, w2_ref, left_ok, right_ok, height, width)
    out_ref[...] = _batchnorm_relu(acc2, g2_ref[...], be2_ref[...], inv_count)


def vgg_block(x_nchw, w1, b1, g1, be1, w2, b2, g2, be2):
    """Fused VGGBlock forward.

    x_nchw: (N, Cin, H, W) f32; conv weights OIHW (PyTorch layout); BN
    gamma/beta (C,).  Returns (N, Cout, H, W) f32.  The conv biases b1/b2 are
    accepted for interface parity but not sent to the kernel: training-mode
    BatchNorm cancels them exactly.
    """
    del b1, b2
    n, cin, h, w = x_nchw.shape
    cm, cout = w1.shape[0], w2.shape[0]
    hw = h * w
    assert PAD >= w + 1, "lane padding must cover one image row + 1"

    # OIHW -> (Cout, 9*Cin), rows ordered (ky, kx, cin) to match the in-kernel
    # im2col tap order; cast once to bf16 for the MXU.
    w1_mat = jnp.transpose(w1, (0, 2, 3, 1)).reshape(cm, 9 * cin).astype(jnp.bfloat16)
    w2_mat = jnp.transpose(w2, (0, 2, 3, 1)).reshape(cout, 9 * cm).astype(jnp.bfloat16)

    g1c = g1.reshape(1, cm, 1).astype(jnp.float32)
    be1c = be1.reshape(1, cm, 1).astype(jnp.float32)
    g2c = g2.reshape(1, cout, 1).astype(jnp.float32)
    be2c = be2.reshape(1, cout, 1).astype(jnp.float32)

    # Lane-dense NCHW layout: H*W flattened onto the lane axis (free reshape).
    x_flat = x_nchw.reshape(n, cin, hw)

    vmem = pl.BlockSpec(memory_space=pltpu.MemorySpace.VMEM)
    kernel = functools.partial(_vgg_block_kernel, height=h, width=w)
    out_flat = pl.pallas_call(
        kernel,
        out_shape=jax.ShapeDtypeStruct((n, cout, hw), jnp.float32),
        in_specs=[vmem] * 7,
        out_specs=vmem,
        scratch_shapes=[
            pltpu.VMEM((n, cin, hw + 2 * PAD), jnp.float32),  # padded input plane
            pltpu.VMEM((n, cm, hw + 2 * PAD), jnp.float32),   # padded conv1 output
        ],
    )(x_flat, w1_mat, g1c, be1c, w2_mat, g2c, be2c)
    # TODO(synk): for realistic VGG sizes, tile over batch / H row-blocks with a
    # halo'd BlockSpec grid (dimension_semantics=("parallel", ...), VMEM budget
    # re-derived for v7x's 64 MiB) and a two-pass cross-tile reduction for the
    # training-mode BN statistics; at this toy size the whole problem fits in
    # VMEM, so a single invocation is used.
    return out_flat.reshape(n, cout, h, w)


def reference_vgg_block(x_nchw, w1, b1, g1, be1, w2, b2, g2, be2):
    """Pure-JAX f32 reference with the exact PyTorch-module semantics."""
    def conv(x, w, b):
        y = lax.conv_general_dilated(
            x, w, window_strides=(1, 1), padding="SAME",
            dimension_numbers=("NCHW", "OIHW", "NCHW"),
            precision=lax.Precision.HIGHEST)
        return y + b.reshape(1, -1, 1, 1)

    def bn_relu(y, g, be):
        mean = jnp.mean(y, axis=(0, 2, 3), keepdims=True)
        var = jnp.mean((y - mean) ** 2, axis=(0, 2, 3), keepdims=True)
        z = (y - mean) * lax.rsqrt(var + EPS) * g.reshape(1, -1, 1, 1) \
            + be.reshape(1, -1, 1, 1)
        return jnp.maximum(z, 0.0)

    h1 = bn_relu(conv(x_nchw, w1, b1), g1, be1)
    return bn_relu(conv(h1, w2, b2), g2, be2)


if __name__ == "__main__":
    # VGGBlock(in_channels=4, middle_channels=8, out_channels=8)
    N, Cin, Cm, Cout, H, W = 2, 4, 8, 8, 16, 16

    key = jax.random.PRNGKey(0)
    ks = jax.random.split(key, 9)

    x = jax.random.normal(ks[0], (N, Cin, H, W), jnp.float32)           # NCHW

    w1 = jax.random.normal(ks[1], (Cm, Cin, 3, 3), jnp.float32) * 0.2   # OIHW
    b1 = jax.random.normal(ks[2], (Cm,), jnp.float32) * 0.1
    g1 = 1.0 + 0.1 * jax.random.normal(ks[3], (Cm,), jnp.float32)
    be1 = 0.1 * jax.random.normal(ks[4], (Cm,), jnp.float32)

    w2 = jax.random.normal(ks[5], (Cout, Cm, 3, 3), jnp.float32) * 0.2
    b2 = jax.random.normal(ks[6], (Cout,), jnp.float32) * 0.1
    g2 = 1.0 + 0.1 * jax.random.normal(ks[7], (Cout,), jnp.float32)
    be2 = 0.1 * jax.random.normal(ks[8], (Cout,), jnp.float32)

    out = vgg_block(x, w1, b1, g1, be1, w2, b2, g2, be2)
    out = jax.block_until_ready(out)

    ref = reference_vgg_block(x, w1, b1, g1, be1, w2, b2, g2, be2)
    assert out.shape == (N, Cout, H, W)
    # bf16 MXU operands (f32 accumulation) introduce ~1e-3-level error vs. the
    # f32 reference; BN / ReLU math is f32.
    max_err = float(jnp.max(jnp.abs(out - ref)))
    assert jnp.allclose(out, ref, atol=2e-2, rtol=2e-2), max_err

    print("KERNEL_OK")
</pallas_src>

<mosaic_0001>
module attributes {stable_mosaic.version = 11 : i64} {
  func.func @_vgg_block_kernel(%arg0: memref<2x4x256xf32, #tpu.memory_space<vmem>>, %arg1: memref<8x36xbf16, #tpu.memory_space<vmem>>, %arg2: memref<1x8x1xf32, #tpu.memory_space<vmem>>, %arg3: memref<1x8x1xf32, #tpu.memory_space<vmem>>, %arg4: memref<8x72xbf16, #tpu.memory_space<vmem>>, %arg5: memref<1x8x1xf32, #tpu.memory_space<vmem>>, %arg6: memref<1x8x1xf32, #tpu.memory_space<vmem>>, %arg7: memref<2x8x256xf32, #tpu.memory_space<vmem>>, %arg8: memref<2x4x512xf32, #tpu.memory_space<vmem>>, %arg9: memref<2x8x512xf32, #tpu.memory_space<vmem>>) attributes {dimension_semantics = [], scalar_prefetch = 0 : i64, scratch_operands = 2 : i64, tpu.core_type = #tpu.core_type<tc>} {
    %0 = tpu.iota {dimensions = array<i32: 2>} : vector<1x1x256xi32>
    %c15_i32 = arith.constant 15 : i32
    %1 = vector.broadcast %c15_i32 : i32 to vector<1x1x256xi32>
    %2 = arith.andi %0, %1 : vector<1x1x256xi32>
    %c0_i32 = arith.constant 0 : i32
    %3 = vector.broadcast %c0_i32 : i32 to vector<1x1x256xi32>
    %4 = arith.cmpi ne, %2, %3 : vector<1x1x256xi32>
    %c15_i32_0 = arith.constant 15 : i32
    %5 = vector.broadcast %c15_i32_0 : i32 to vector<1x1x256xi32>
    %6 = arith.cmpi ne, %2, %5 : vector<1x1x256xi32>
    %cst = arith.constant 0.000000e+00 : f32
    %7 = vector.broadcast %cst : f32 to vector<2x4x128xf32>
    %c0 = arith.constant 0 : index
    %c0_1 = arith.constant 0 : index
    %c0_2 = arith.constant 0 : index
    %8 = vector.load %arg8[%c0, %c0_1, %c0_2] : memref<2x4x512xf32, #tpu.memory_space<vmem>>, vector<2x4x128xf32>
    tpu.vector_store %arg8[%c0, %c0_1, %c0_2], %7 {strides = array<i32>} : memref<2x4x512xf32, #tpu.memory_space<vmem>>, vector<2x4x128xf32>,
    %c0_3 = arith.constant 0 : index
    %c0_4 = arith.constant 0 : index
    %c384 = arith.constant 384 : index
    %9 = vector.load %arg8[%c0_3, %c0_4, %c384] : memref<2x4x512xf32, #tpu.memory_space<vmem>>, vector<2x4x128xf32>
    tpu.vector_store %arg8[%c0_3, %c0_4, %c384], %7 {strides = array<i32>} : memref<2x4x512xf32, #tpu.memory_space<vmem>>, vector<2x4x128xf32>,
    %c0_5 = arith.constant 0 : index
    %c0_6 = arith.constant 0 : index
    %c0_7 = arith.constant 0 : index
    %10 = vector.load %arg0[%c0_5, %c0_6, %c0_7] : memref<2x4x256xf32, #tpu.memory_space<vmem>>, vector<2x4x256xf32>
    %c0_8 = arith.constant 0 : index
    %c0_9 = arith.constant 0 : index
    %c128 = arith.constant 128 : index
    %11 = vector.load %arg8[%c0_8, %c0_9, %c128] : memref<2x4x512xf32, #tpu.memory_space<vmem>>, vector<2x4x256xf32>
    tpu.vector_store %arg8[%c0_8, %c0_9, %c128], %10 {strides = array<i32>} : memref<2x4x512xf32, #tpu.memory_space<vmem>>, vector<2x4x256xf32>,
    %c0_10 = arith.constant 0 : index
    %c0_11 = arith.constant 0 : index
    %c111 = arith.constant 111 : index
    %12 = vector.load %arg8[%c0_10, %c0_11, %c111] : memref<2x4x512xf32, #tpu.memory_space<vmem>>, vector<2x4x256xf32>
    %cst_12 = arith.constant 0.000000e+00 : f32
    %13 = vector.shape_cast %4 : vector<1x1x256xi1> to vector<1x1x256xi1>
    %14 = vector.broadcast %13 : vector<1x1x256xi1> to vector<2x4x256xi1>
    %15 = vector.broadcast %cst_12 : f32 to vector<2x4x256xf32>
    %16 = arith.select %14, %12, %15 : vector<2x4x256xi1>, vector<2x4x256xf32>
    %c0_13 = arith.constant 0 : index
    %c0_14 = arith.constant 0 : index
    %c112 = arith.constant 112 : index
    %17 = vector.load %arg8[%c0_13, %c0_14, %c112] : memref<2x4x512xf32, #tpu.memory_space<vmem>>, vector<2x4x256xf32>
    %c0_15 = arith.constant 0 : index
    %c0_16 = arith.constant 0 : index
    %c113 = arith.constant 113 : index
    %18 = vector.load %arg8[%c0_15, %c0_16, %c113] : memref<2x4x512xf32, #tpu.memory_space<vmem>>, vector<2x4x256xf32>
    %cst_17 = arith.constant 0.000000e+00 : f32
    %19 = vector.shape_cast %6 : vector<1x1x256xi1> to vector<1x1x256xi1>
    %20 = vector.broadcast %19 : vector<1x1x256xi1> to vector<2x4x256xi1>
    %21 = vector.broadcast %cst_17 : f32 to vector<2x4x256xf32>
    %22 = arith.select %20, %18, %21 : vector<2x4x256xi1>, vector<2x4x256xf32>
    %c0_18 = arith.constant 0 : index
    %c0_19 = arith.constant 0 : index
    %c127 = arith.constant 127 : index
    %23 = vector.load %arg8[%c0_18, %c0_19, %c127] : memref<2x4x512xf32, #tpu.memory_space<vmem>>, vector<2x4x256xf32>
    %cst_20 = arith.constant 0.000000e+00 : f32
    %24 = vector.shape_cast %4 : vector<1x1x256xi1> to vector<1x1x256xi1>
    %25 = vector.broadcast %24 : vector<1x1x256xi1> to vector<2x4x256xi1>
    %26 = vector.broadcast %cst_20 : f32 to vector<2x4x256xf32>
    %27 = arith.select %25, %23, %26 : vector<2x4x256xi1>, vector<2x4x256xf32>
    %c0_21 = arith.constant 0 : index
    %c0_22 = arith.constant 0 : index
    %c128_23 = arith.constant 128 : index
    %28 = vector.load %arg8[%c0_21, %c0_22, %c128_23] : memref<2x4x512xf32, #tpu.memory_space<vmem>>, vector<2x4x256xf32>
    %c0_24 = arith.constant 0 : index
    %c0_25 = arith.constant 0 : index
    %c129 = arith.constant 129 : index
    %29 = vector.load %arg8[%c0_24, %c0_25, %c129] : memref<2x4x512xf32, #tpu.memory_space<vmem>>, vector<2x4x256xf32>
    %cst_26 = arith.constant 0.000000e+00 : f32
    %30 = vector.shape_cast %6 : vector<1x1x256xi1> to vector<1x1x256xi1>
    %31 = vector.broadcast %30 : vector<1x1x256xi1> to vector<2x4x256xi1>
    %32 = vector.broadcast %cst_26 : f32 to vector<2x4x256xf32>
    %33 = arith.select %31, %29, %32 : vector<2x4x256xi1>, vector<2x4x256xf32>
    %c0_27 = arith.constant 0 : index
    %c0_28 = arith.constant 0 : index
    %c143 = arith.constant 143 : index
    %34 = vector.load %arg8[%c0_27, %c0_28, %c143] : memref<2x4x512xf32, #tpu.memory_space<vmem>>, vector<2x4x256xf32>
    %cst_29 = arith.constant 0.000000e+00 : f32
    %35 = vector.shape_cast %4 : vector<1x1x256xi1> to vector<1x1x256xi1>
    %36 = vector.broadcast %35 : vector<1x1x256xi1> to vector<2x4x256xi1>
    %37 = vector.broadcast %cst_29 : f32 to vector<2x4x256xf32>
    %38 = arith.select %36, %34, %37 : vector<2x4x256xi1>, vector<2x4x256xf32>
    %c0_30 = arith.constant 0 : index
    %c0_31 = arith.constant 0 : index
    %c144 = arith.constant 144 : index
    %39 = vector.load %arg8[%c0_30, %c0_31, %c144] : memref<2x4x512xf32, #tpu.memory_space<vmem>>, vector<2x4x256xf32>
    %c0_32 = arith.constant 0 : index
    %c0_33 = arith.constant 0 : index
    %c145 = arith.constant 145 : index
    %40 = vector.load %arg8[%c0_32, %c0_33, %c145] : memref<2x4x512xf32, #tpu.memory_space<vmem>>, vector<2x4x256xf32>
    %cst_34 = arith.constant 0.000000e+00 : f32
    %41 = vector.shape_cast %6 : vector<1x1x256xi1> to vector<1x1x256xi1>
    %42 = vector.broadcast %41 : vector<1x1x256xi1> to vector<2x4x256xi1>
    %43 = vector.broadcast %cst_34 : f32 to vector<2x4x256xf32>
    %44 = arith.select %42, %40, %43 : vector<2x4x256xi1>, vector<2x4x256xf32>
    %45 = vector.shape_cast %16 : vector<2x4x256xf32> to vector<1x2x4x256xf32>
    %46 = vector.shape_cast %17 : vector<2x4x256xf32> to vector<1x2x4x256xf32>
    %47 = vector.shape_cast %22 : vector<2x4x256xf32> to vector<1x2x4x256xf32>
    %48 = vector.shape_cast %27 : vector<2x4x256xf32> to vector<1x2x4x256xf32>
    %49 = vector.shape_cast %28 : vector<2x4x256xf32> to vector<1x2x4x256xf32>
    %50 = vector.shape_cast %33 : vector<2x4x256xf32> to vector<1x2x4x256xf32>
    %51 = vector.shape_cast %38 : vector<2x4x256xf32> to vector<1x2x4x256xf32>
    %52 = vector.shape_cast %39 : vector<2x4x256xf32> to vector<1x2x4x256xf32>
    %53 = vector.shape_cast %44 : vector<2x4x256xf32> to vector<1x2x4x256xf32>
    %54 = tpu.concatenate %45, %46, %47, %48, %49, %50, %51, %52, %53 in 0 : vector<1x2x4x256xf32>, vector<1x2x4x256xf32>, vector<1x2x4x256xf32>, vector<1x2x4x256xf32>, vector<1x2x4x256xf32>, vector<1x2x4x256xf32>, vector<1x2x4x256xf32>, vector<1x2x4x256xf32>, vector<1x2x4x256xf32> -> vector<9x2x4x256xf32>
    %c0_35 = arith.constant 0 : index
    %c0_36 = arith.constant 0 : index
    %55 = vector.load %arg1[%c0_35, %c0_36] : memref<8x36xbf16, #tpu.memory_space<vmem>>, vector<8x36xbf16>
    %56 = vector.extract_strided_slice %54 {offsets = [0, 0, 0, 0], sizes = [9, 1, 4, 256], strides = [1, 1, 1, 1]} : vector<9x2x4x256xf32> to vector<9x1x4x256xf32>
    %57 = vector.shape_cast %56 : vector<9x1x4x256xf32> to vector<9x4x256xf32>
    %58 = vector.shape_cast %57 : vector<9x4x256xf32> to vector<36x256xf32>
    %59 = arith.truncf %58 : vector<36x256xf32> to vector<36x256xbf16>
    %cst_37 = arith.constant dense<0.000000e+00> : vector<8x256xf32>
    %60 = tpu.matmul %55, %59, %cst_37 {dimension_numbers = #tpu.dot_dimension_numbers<[1], [0], [0], [1], [0, 0, 1, 1], [], []>} : vector<8x36xbf16>, vector<36x256xbf16>, vector<8x256xf32> -> vector<8x256xf32>
    %61 = vector.extract_strided_slice %54 {offsets = [0, 1, 0, 0], sizes = [9, 1, 4, 256], strides = [1, 1, 1, 1]} : vector<9x2x4x256xf32> to vector<9x1x4x256xf32>
    %62 = vector.shape_cast %61 : vector<9x1x4x256xf32> to vector<9x4x256xf32>
    %63 = vector.shape_cast %62 : vector<9x4x256xf32> to vector<36x256xf32>
    %64 = arith.truncf %63 : vector<36x256xf32> to vector<36x256xbf16>
    %cst_38 = arith.constant dense<0.000000e+00> : vector<8x256xf32>
    %65 = tpu.matmul %55, %64, %cst_38 {dimension_numbers = #tpu.dot_dimension_numbers<[1], [0], [0], [1], [0, 0, 1, 1], [], []>} : vector<8x36xbf16>, vector<36x256xbf16>, vector<8x256xf32> -> vector<8x256xf32>
    %66 = vector.shape_cast %60 : vector<8x256xf32> to vector<1x8x256xf32>
    %67 = vector.shape_cast %65 : vector<8x256xf32> to vector<1x8x256xf32>
    %68 = tpu.concatenate %66, %67 in 0 : vector<1x8x256xf32>, vector<1x8x256xf32> -> vector<2x8x256xf32>
    %c0_39 = arith.constant 0 : index
    %c0_40 = arith.constant 0 : index
    %c0_41 = arith.constant 0 : index
    %69 = vector.load %arg2[%c0_39, %c0_40, %c0_41] : memref<1x8x1xf32, #tpu.memory_space<vmem>>, vector<1x8x1xf32>
    %c0_42 = arith.constant 0 : index
    %c0_43 = arith.constant 0 : index
    %c0_44 = arith.constant 0 : index
    %70 = vector.load %arg3[%c0_42, %c0_43, %c0_44] : memref<1x8x1xf32, #tpu.memory_space<vmem>>, vector<1x8x1xf32>
    %cst_45 = arith.constant dense<0.000000e+00> : vector<2x8xf32>
    %71 = vector.multi_reduction <add>, %68, %cst_45 [2] : vector<2x8x256xf32> to vector<2x8xf32>
    %72 = vector.shape_cast %71 : vector<2x8xf32> to vector<2x8x1xf32>
    %cst_46 = arith.constant dense<0.000000e+00> : vector<8x1xf32>
    %73 = vector.multi_reduction <add>, %72, %cst_46 [0] : vector<2x8x1xf32> to vector<8x1xf32>
    %74 = vector.shape_cast %73 : vector<8x1xf32> to vector<1x8x1xf32>
    %75 = arith.mulf %68, %68 : vector<2x8x256xf32>
    %cst_47 = arith.constant dense<0.000000e+00> : vector<2x8xf32>
    %76 = vector.multi_reduction <add>, %75, %cst_47 [2] : vector<2x8x256xf32> to vector<2x8xf32>
    %77 = vector.shape_cast %76 : vector<2x8xf32> to vector<2x8x1xf32>
    %cst_48 = arith.constant dense<0.000000e+00> : vector<8x1xf32>
    %78 = vector.multi_reduction <add>, %77, %cst_48 [0] : vector<2x8x1xf32> to vector<8x1xf32>
    %79 = vector.shape_cast %78 : vector<8x1xf32> to vector<1x8x1xf32>
    %cst_49 = arith.constant 0.001953125 : f32
    %80 = vector.broadcast %cst_49 : f32 to vector<1x8x1xf32>
    %81 = arith.mulf %74, %80 : vector<1x8x1xf32>
    %cst_50 = arith.constant 0.001953125 : f32
    %82 = vector.broadcast %cst_50 : f32 to vector<1x8x1xf32>
    %83 = arith.mulf %79, %82 : vector<1x8x1xf32>
    %84 = arith.mulf %81, %81 : vector<1x8x1xf32>
    %85 = arith.subf %83, %84 : vector<1x8x1xf32>
    %cst_51 = arith.constant 9.99999974E-6 : f32
    %86 = vector.broadcast %cst_51 : f32 to vector<1x8x1xf32>
    %87 = arith.addf %85, %86 : vector<1x8x1xf32>
    %88 = math.rsqrt %87 : vector<1x8x1xf32>
    %89 = arith.mulf %69, %88 : vector<1x8x1xf32>
    %90 = arith.mulf %81, %89 : vector<1x8x1xf32>
    %91 = arith.subf %70, %90 : vector<1x8x1xf32>
    %92 = vector.broadcast %89 : vector<1x8x1xf32> to vector<2x8x256xf32>
    %93 = arith.mulf %68, %92 : vector<2x8x256xf32>
    %94 = vector.broadcast %91 : vector<1x8x1xf32> to vector<2x8x256xf32>
    %95 = arith.addf %93, %94 : vector<2x8x256xf32>
    %cst_52 = arith.constant 0.000000e+00 : f32
    %96 = vector.broadcast %cst_52 : f32 to vector<2x8x256xf32>
    %97 = arith.maximumf %95, %96 : vector<2x8x256xf32>
    %cst_53 = arith.constant 0.000000e+00 : f32
    %98 = vector.broadcast %cst_53 : f32 to vector<2x8x128xf32>
    %c0_54 = arith.constant 0 : index
    %c0_55 = arith.constant 0 : index
    %c0_56 = arith.constant 0 : index
    %99 = vector.load %arg9[%c0_54, %c0_55, %c0_56] : memref<2x8x512xf32, #tpu.memory_space<vmem>>, vector<2x8x128xf32>
    tpu.vector_store %arg9[%c0_54, %c0_55, %c0_56], %98 {strides = array<i32>} : memref<2x8x512xf32, #tpu.memory_space<vmem>>, vector<2x8x128xf32>,
    %c0_57 = arith.constant 0 : index
    %c0_58 = arith.constant 0 : index
    %c384_59 = arith.constant 384 : index
    %100 = vector.load %arg9[%c0_57, %c0_58, %c384_59] : memref<2x8x512xf32, #tpu.memory_space<vmem>>, vector<2x8x128xf32>
    tpu.vector_store %arg9[%c0_57, %c0_58, %c384_59], %98 {strides = array<i32>} : memref<2x8x512xf32, #tpu.memory_space<vmem>>, vector<2x8x128xf32>,
    %c0_60 = arith.constant 0 : index
    %c0_61 = arith.constant 0 : index
    %c128_62 = arith.constant 128 : index
    %101 = vector.load %arg9[%c0_60, %c0_61, %c128_62] : memref<2x8x512xf32, #tpu.memory_space<vmem>>, vector<2x8x256xf32>
    tpu.vector_store %arg9[%c0_60, %c0_61, %c128_62], %97 {strides = array<i32>} : memref<2x8x512xf32, #tpu.memory_space<vmem>>, vector<2x8x256xf32>,
    %c0_63 = arith.constant 0 : index
    %c0_64 = arith.constant 0 : index
    %c111_65 = arith.constant 111 : index
    %102 = vector.load %arg9[%c0_63, %c0_64, %c111_65] : memref<2x8x512xf32, #tpu.memory_space<vmem>>, vector<2x8x256xf32>
    %cst_66 = arith.constant 0.000000e+00 : f32
    %103 = vector.shape_cast %4 : vector<1x1x256xi1> to vector<1x1x256xi1>
    %104 = vector.broadcast %103 : vector<1x1x256xi1> to vector<2x8x256xi1>
    %105 = vector.broadcast %cst_66 : f32 to vector<2x8x256xf32>
    %106 = arith.select %104, %102, %105 : vector<2x8x256xi1>, vector<2x8x256xf32>
    %c0_67 = arith.constant 0 : index
    %c0_68 = arith.constant 0 : index
    %c112_69 = arith.constant 112 : index
    %107 = vector.load %arg9[%c0_67, %c0_68, %c112_69] : memref<2x8x512xf32, #tpu.memory_space<vmem>>, vector<2x8x256xf32>
    %c0_70 = arith.constant 0 : index
    %c0_71 = arith.constant 0 : index
    %c113_72 = arith.constant 113 : index
    %108 = vector.load %arg9[%c0_70, %c0_71, %c113_72] : memref<2x8x512xf32, #tpu.memory_space<vmem>>, vector<2x8x256xf32>
    %cst_73 = arith.constant 0.000000e+00 : f32
    %109 = vector.shape_cast %6 : vector<1x1x256xi1> to vector<1x1x256xi1>
    %110 = vector.broadcast %109 : vector<1x1x256xi1> to vector<2x8x256xi1>
    %111 = vector.broadcast %cst_73 : f32 to vector<2x8x256xf32>
    %112 = arith.select %110, %108, %111 : vector<2x8x256xi1>, vector<2x8x256xf32>
    %c0_74 = arith.constant 0 : index
    %c0_75 = arith.constant 0 : index
    %c127_76 = arith.constant 127 : index
    %113 = vector.load %arg9[%c0_74, %c0_75, %c127_76] : memref<2x8x512xf32, #tpu.memory_space<vmem>>, vector<2x8x256xf32>
    %cst_77 = arith.constant 0.000000e+00 : f32
    %114 = vector.shape_cast %4 : vector<1x1x256xi1> to vector<1x1x256xi1>
    %115 = vector.broadcast %114 : vector<1x1x256xi1> to vector<2x8x256xi1>
    %116 = vector.broadcast %cst_77 : f32 to vector<2x8x256xf32>
    %117 = arith.select %115, %113, %116 : vector<2x8x256xi1>, vector<2x8x256xf32>
    %c0_78 = arith.constant 0 : index
    %c0_79 = arith.constant 0 : index
    %c128_80 = arith.constant 128 : index
    %118 = vector.load %arg9[%c0_78, %c0_79, %c128_80] : memref<2x8x512xf32, #tpu.memory_space<vmem>>, vector<2x8x256xf32>
    %c0_81 = arith.constant 0 : index
    %c0_82 = arith.constant 0 : index
    %c129_83 = arith.constant 129 : index
    %119 = vector.load %arg9[%c0_81, %c0_82, %c129_83] : memref<2x8x512xf32, #tpu.memory_space<vmem>>, vector<2x8x256xf32>
    %cst_84 = arith.constant 0.000000e+00 : f32
    %120 = vector.shape_cast %6 : vector<1x1x256xi1> to vector<1x1x256xi1>
    %121 = vector.broadcast %120 : vector<1x1x256xi1> to vector<2x8x256xi1>
    %122 = vector.broadcast %cst_84 : f32 to vector<2x8x256xf32>
    %123 = arith.select %121, %119, %122 : vector<2x8x256xi1>, vector<2x8x256xf32>
    %c0_85 = arith.constant 0 : index
    %c0_86 = arith.constant 0 : index
    %c143_87 = arith.constant 143 : index
    %124 = vector.load %arg9[%c0_85, %c0_86, %c143_87] : memref<2x8x512xf32, #tpu.memory_space<vmem>>, vector<2x8x256xf32>
    %cst_88 = arith.constant 0.000000e+00 : f32
    %125 = vector.shape_cast %4 : vector<1x1x256xi1> to vector<1x1x256xi1>
    %126 = vector.broadcast %125 : vector<1x1x256xi1> to vector<2x8x256xi1>
    %127 = vector.broadcast %cst_88 : f32 to vector<2x8x256xf32>
    %128 = arith.select %126, %124, %127 : vector<2x8x256xi1>, vector<2x8x256xf32>
    %c0_89 = arith.constant 0 : index
    %c0_90 = arith.constant 0 : index
    %c144_91 = arith.constant 144 : index
    %129 = vector.load %arg9[%c0_89, %c0_90, %c144_91] : memref<2x8x512xf32, #tpu.memory_space<vmem>>, vector<2x8x256xf32>
    %c0_92 = arith.constant 0 : index
    %c0_93 = arith.constant 0 : index
    %c145_94 = arith.constant 145 : index
    %130 = vector.load %arg9[%c0_92, %c0_93, %c145_94] : memref<2x8x512xf32, #tpu.memory_space<vmem>>, vector<2x8x256xf32>
    %cst_95 = arith.constant 0.000000e+00 : f32
    %131 = vector.shape_cast %6 : vector<1x1x256xi1> to vector<1x1x256xi1>
    %132 = vector.broadcast %131 : vector<1x1x256xi1> to vector<2x8x256xi1>
    %133 = vector.broadcast %cst_95 : f32 to vector<2x8x256xf32>
    %134 = arith.select %132, %130, %133 : vector<2x8x256xi1>, vector<2x8x256xf32>
    %135 = vector.shape_cast %106 : vector<2x8x256xf32> to vector<1x2x8x256xf32>
    %136 = vector.shape_cast %107 : vector<2x8x256xf32> to vector<1x2x8x256xf32>
    %137 = vector.shape_cast %112 : vector<2x8x256xf32> to vector<1x2x8x256xf32>
    %138 = vector.shape_cast %117 : vector<2x8x256xf32> to vector<1x2x8x256xf32>
    %139 = vector.shape_cast %118 : vector<2x8x256xf32> to vector<1x2x8x256xf32>
    %140 = vector.shape_cast %123 : vector<2x8x256xf32> to vector<1x2x8x256xf32>
    %141 = vector.shape_cast %128 : vector<2x8x256xf32> to vector<1x2x8x256xf32>
    %142 = vector.shape_cast %129 : vector<2x8x256xf32> to vector<1x2x8x256xf32>
    %143 = vector.shape_cast %134 : vector<2x8x256xf32> to vector<1x2x8x256xf32>
    %144 = tpu.concatenate %135, %136, %137, %138, %139, %140, %141, %142, %143 in 0 : vector<1x2x8x256xf32>, vector<1x2x8x256xf32>, vector<1x2x8x256xf32>, vector<1x2x8x256xf32>, vector<1x2x8x256xf32>, vector<1x2x8x256xf32>, vector<1x2x8x256xf32>, vector<1x2x8x256xf32>, vector<1x2x8x256xf32> -> vector<9x2x8x256xf32>
    %c0_96 = arith.constant 0 : index
    %c0_97 = arith.constant 0 : index
    %145 = vector.load %arg4[%c0_96, %c0_97] : memref<8x72xbf16, #tpu.memory_space<vmem>>, vector<8x72xbf16>
    %146 = vector.extract_strided_slice %144 {offsets = [0, 0, 0, 0], sizes = [9, 1, 8, 256], strides = [1, 1, 1, 1]} : vector<9x2x8x256xf32> to vector<9x1x8x256xf32>
    %147 = vector.shape_cast %146 : vector<9x1x8x256xf32> to vector<9x8x256xf32>
    %148 = vector.shape_cast %147 : vector<9x8x256xf32> to vector<72x256xf32>
    %149 = arith.truncf %148 : vector<72x256xf32> to vector<72x256xbf16>
    %cst_98 = arith.constant dense<0.000000e+00> : vector<8x256xf32>
    %150 = tpu.matmul %145, %149, %cst_98 {dimension_numbers = #tpu.dot_dimension_numbers<[1], [0], [0], [1], [0, 0, 1, 1], [], []>} : vector<8x72xbf16>, vector<72x256xbf16>, vector<8x256xf32> -> vector<8x256xf32>
    %151 = vector.extract_strided_slice %144 {offsets = [0, 1, 0, 0], sizes = [9, 1, 8, 256], strides = [1, 1, 1, 1]} : vector<9x2x8x256xf32> to vector<9x1x8x256xf32>
    %152 = vector.shape_cast %151 : vector<9x1x8x256xf32> to vector<9x8x256xf32>
    %153 = vector.shape_cast %152 : vector<9x8x256xf32> to vector<72x256xf32>
    %154 = arith.truncf %153 : vector<72x256xf32> to vector<72x256xbf16>
    %cst_99 = arith.constant dense<0.000000e+00> : vector<8x256xf32>
    %155 = tpu.matmul %145, %154, %cst_99 {dimension_numbers = #tpu.dot_dimension_numbers<[1], [0], [0], [1], [0, 0, 1, 1], [], []>} : vector<8x72xbf16>, vector<72x256xbf16>, vector<8x256xf32> -> vector<8x256xf32>
    %156 = vector.shape_cast %150 : vector<8x256xf32> to vector<1x8x256xf32>
    %157 = vector.shape_cast %155 : vector<8x256xf32> to vector<1x8x256xf32>
    %158 = tpu.concatenate %156, %157 in 0 : vector<1x8x256xf32>, vector<1x8x256xf32> -> vector<2x8x256xf32>
    %c0_100 = arith.constant 0 : index
    %c0_101 = arith.constant 0 : index
    %c0_102 = arith.constant 0 : index
    %159 = vector.load %arg5[%c0_100, %c0_101, %c0_102] : memref<1x8x1xf32, #tpu.memory_space<vmem>>, vector<1x8x1xf32>
    %c0_103 = arith.constant 0 : index
    %c0_104 = arith.constant 0 : index
    %c0_105 = arith.constant 0 : index
    %160 = vector.load %arg6[%c0_103, %c0_104, %c0_105] : memref<1x8x1xf32, #tpu.memory_space<vmem>>, vector<1x8x1xf32>
    %cst_106 = arith.constant dense<0.000000e+00> : vector<2x8xf32>
    %161 = vector.multi_reduction <add>, %158, %cst_106 [2] : vector<2x8x256xf32> to vector<2x8xf32>
    %162 = vector.shape_cast %161 : vector<2x8xf32> to vector<2x8x1xf32>
    %cst_107 = arith.constant dense<0.000000e+00> : vector<8x1xf32>
    %163 = vector.multi_reduction <add>, %162, %cst_107 [0] : vector<2x8x1xf32> to vector<8x1xf32>
    %164 = vector.shape_cast %163 : vector<8x1xf32> to vector<1x8x1xf32>
    %165 = arith.mulf %158, %158 : vector<2x8x256xf32>
    %cst_108 = arith.constant dense<0.000000e+00> : vector<2x8xf32>
    %166 = vector.multi_reduction <add>, %165, %cst_108 [2] : vector<2x8x256xf32> to vector<2x8xf32>
    %167 = vector.shape_cast %166 : vector<2x8xf32> to vector<2x8x1xf32>
    %cst_109 = arith.constant dense<0.000000e+00> : vector<8x1xf32>
    %168 = vector.multi_reduction <add>, %167, %cst_109 [0] : vector<2x8x1xf32> to vector<8x1xf32>
    %169 = vector.shape_cast %168 : vector<8x1xf32> to vector<1x8x1xf32>
    %cst_110 = arith.constant 0.001953125 : f32
    %170 = vector.broadcast %cst_110 : f32 to vector<1x8x1xf32>
    %171 = arith.mulf %164, %170 : vector<1x8x1xf32>
    %cst_111 = arith.constant 0.001953125 : f32
    %172 = vector.broadcast %cst_111 : f32 to vector<1x8x1xf32>
    %173 = arith.mulf %169, %172 : vector<1x8x1xf32>
    %174 = arith.mulf %171, %171 : vector<1x8x1xf32>
    %175 = arith.subf %173, %174 : vector<1x8x1xf32>
    %cst_112 = arith.constant 9.99999974E-6 : f32
    %176 = vector.broadcast %cst_112 : f32 to vector<1x8x1xf32>
    %177 = arith.addf %175, %176 : vector<1x8x1xf32>
    %178 = math.rsqrt %177 : vector<1x8x1xf32>
    %179 = arith.mulf %159, %178 : vector<1x8x1xf32>
    %180 = arith.mulf %171, %179 : vector<1x8x1xf32>
    %181 = arith.subf %160, %180 : vector<1x8x1xf32>
    %182 = vector.broadcast %179 : vector<1x8x1xf32> to vector<2x8x256xf32>
    %183 = arith.mulf %158, %182 : vector<2x8x256xf32>
    %184 = vector.broadcast %181 : vector<1x8x1xf32> to vector<2x8x256xf32>
    %185 = arith.addf %183, %184 : vector<2x8x256xf32>
    %cst_113 = arith.constant 0.000000e+00 : f32
    %186 = vector.broadcast %cst_113 : f32 to vector<2x8x256xf32>
    %187 = arith.maximumf %185, %186 : vector<2x8x256xf32>
    %c0_114 = arith.constant 0 : index
    %c0_115 = arith.constant 0 : index
    %c0_116 = arith.constant 0 : index
    %188 = vector.load %arg7[%c0_114, %c0_115, %c0_116] : memref<2x8x256xf32, #tpu.memory_space<vmem>>, vector<2x8x256xf32>
    tpu.vector_store %arg7[%c0_114, %c0_115, %c0_116], %187 {strides = array<i32>} : memref<2x8x256xf32, #tpu.memory_space<vmem>>, vector<2x8x256xf32>,
    return
  }
}

</mosaic_0001>

<llo_original>
// kernel: tpu_custom_call.1
$region0: #{tpu_custom_call.1}
  #allocation0 [shape = 'u32[]', space=smem, size = 0x4, offset = 0x4, fixed_abs, tag = 'smem constant byte address 0x4 - core index']
  #allocation1 [shape = 'u32[144,128]{1,0:T(1,128)}', space=vmem, size = 0x12000, scoped, tag = 'internal scratch']
  #allocation2 [shape = 'f32[2,4,512]{2,1,0:T(4,128)}', space=vmem, size = 0x4000, scoped, tag = 'scratch operand']
  #allocation3 [shape = 'f32[2,8,512]{2,1,0:T(8,128)}', space=vmem, size = 0x8000, scoped, tag = 'scratch operand']
  %s0 = inlined_call_operand.vmem [shape: f32[2,4,256], index: 0, kind: input, shape index: {}]
  %s1 = inlined_call_operand.vmem [shape: bf16[8,36], index: 1, kind: input, shape index: {}]
  %s2 = inlined_call_operand.vmem [shape: f32[1,8,1], index: 2, kind: input, shape index: {}]
  %s3 = inlined_call_operand.vmem [shape: f32[1,8,1], index: 3, kind: input, shape index: {}]
  %s4 = inlined_call_operand.vmem [shape: bf16[8,72], index: 4, kind: input, shape index: {}]
  %s5 = inlined_call_operand.vmem [shape: f32[1,8,1], index: 5, kind: input, shape index: {}]
  %s6 = inlined_call_operand.vmem [shape: f32[1,8,1], index: 6, kind: input, shape index: {}]
  %s7 = inlined_call_operand.hbm [shape: f32[2,8,256], index: 7, kind: output, shape index: {}]
  %s8 = sld [smem:[#allocation0]]
  $region38: #{tpu_custom_call.1} parent=0
    _
  %s10 = ssub.s32 1, %s8
  %s11 = scalar_select 0, %s10, %s8
  $region1: #{tpu_custom_call.1} parent=0
    #allocation4 [shape = 'u8[16384]{0}', space=vmem, size = 0x4000, scoped, tag = 'output window, operand 0, single buffered']
    #allocation5 [shape = 's32[1]{0}', space=sflag, size = 0x4, scoped, tag = 'scoped memory for tpu_custom_call.1']
    %12 = vsyncpa [#allocation5], 0
    // Predicated region
    $region2: #{tpu_custom_call.1} parent=1 // pred_check
      _
    $region3: #{tpu_custom_call.1} parent=1 // pred_check_branch
      %14 = sbr.rel (0) target = $region5
    $region4: #{tpu_custom_call.1} parent=1 // pred_region
      _
    $region5: #{tpu_custom_call.1} parent=1 // pred_fallthru
      _
    // Predicated region
    $region6: #{tpu_custom_call.1} parent=1 // pred_check
      _
    $region7: #{tpu_custom_call.1} parent=1 // pred_check_branch
      %16 = sbr.rel (0) target = $region9
    $region8: #{tpu_custom_call.1} parent=1 // pred_region
      _
    $region9: #{tpu_custom_call.1} parent=1 // pred_fallthru
      _
    // Predicated region
    $region10: #{tpu_custom_call.1} parent=1 // pred_check
      _
    $region11: #{tpu_custom_call.1} parent=1 // pred_check_branch
      %18 = sbr.rel (0) target = $region13
    $region12: #{tpu_custom_call.1} parent=1 // pred_region
      _
    $region13: #{tpu_custom_call.1} parent=1 // pred_fallthru
      _
    // Predicated region
    $region14: #{tpu_custom_call.1} parent=1 // pred_check
      _
    $region15: #{tpu_custom_call.1} parent=1 // pred_check_branch
      %20 = sbr.rel (0) target = $region17
    $region16: #{tpu_custom_call.1} parent=1 // pred_region
      _
    $region17: #{tpu_custom_call.1} parent=1 // pred_fallthru
      _
    // Predicated region
    $region18: #{tpu_custom_call.1} parent=1 // pred_check
      _
    $region19: #{tpu_custom_call.1} parent=1 // pred_check_branch
      %22 = sbr.rel (0) target = $region21
    $region20: #{tpu_custom_call.1} parent=1 // pred_region
      _
    $region21: #{tpu_custom_call.1} parent=1 // pred_fallthru
      _
    // Predicated region
    $region22: #{tpu_custom_call.1} parent=1 // pred_check
      _
    $region23: #{tpu_custom_call.1} parent=1 // pred_check_branch
      %24 = sbr.rel (0) target = $region25
    $region24: #{tpu_custom_call.1} parent=1 // pred_region
      _
    $region25: #{tpu_custom_call.1} parent=1 // pred_fallthru
      _
    // Predicated region
    $region26: #{tpu_custom_call.1} parent=1 // pred_check
      _
    $region27: #{tpu_custom_call.1} parent=1 // pred_check_branch
      %26 = sbr.rel (0) target = $region29
    $region28: #{tpu_custom_call.1} parent=1 // pred_region
      _
    $region29: #{tpu_custom_call.1} parent=1 // pred_fallthru
      _
    %v28 = vlaneseq
    %v29 = vand.u32 %v28, 127
    %v30 = vadd.s32 %v29, 128
    %v31 = vand.u32 %v29, 15
    %v32 = vand.u32 %v30, 15
    %vm33 = vcmp.ne.s32.totalorder %v31, 0
    %vm34 = vcmp.ne.s32.totalorder %v32, 0
    %vm35 = vcmp.ne.s32.totalorder %v31, 15
    %vm36 = vcmp.ne.s32.totalorder %v32, 15
    %37 = vst [vmem:[#allocation2] sm:$0xf] 0.0
    %38 = vst [vmem:[#allocation2 + $0x10] sm:$0xf] 0.0
    %39 = vst [vmem:[#allocation2 + $0xc] sm:$0xf] 0.0
    %40 = vst [vmem:[#allocation2 + $0x1c] sm:$0xf] 0.0
    %v41 = vld [vmem:[%s0] sm:$0xff]
    %v42 = vld [vmem:[%s0 + $0x8] sm:$0xff]
    %43 = vst [vmem:[#allocation2 + $0x4] sm:$0xff] %v41
    %44 = vst [vmem:[#allocation2 + $0x14] sm:$0xff] %v42
    %v45 = vld [vmem:[#allocation2] sm:$0xff]
    %v46 = vld [vmem:[#allocation2 + $0x8] sm:$0xf]
    %v47 = vld [vmem:[#allocation2 + $0x10] sm:$0xff]
    %v48 = vld [vmem:[#allocation2 + $0x18] sm:$0xf]
    %v49 = vsel %vm33, 1, 0
    %v50 = vsel %vm34, 1, 0
    %vm51 = vcmp.eq.s32.totalorder %v49, 1
    %vm52 = vcmp.eq.s32.totalorder %v50, 1
    %v57 = vcombine.high %v45, %v45
    %v58 = vcombine.high %v47, %v47
    %59 = vrot.lane.b32.xlu0 %v45, 17
    %v60 = vpop.permute.xlu0 %59
    %61 = vrot.lane.b32.xlu0 %v57, 17
    %v62 = vpop.permute.xlu0 %61
    %63 = vrot.lane.b32.xlu0 %v46, 17
    %v64 = vpop.permute.xlu0 %63
    %65 = vrot.lane.b32.xlu0 %v47, 17
    %v66 = vpop.permute.xlu0 %65
    %67 = vrot.lane.b32.xlu0 %v58, 17
    %v68 = vpop.permute.xlu0 %67
    %69 = vrot.lane.b32.xlu0 %v48, 17
    %v70 = vpop.permute.xlu0 %69
    %vm71 = vcmask 138240
    %v72 = vsel %vm71, %v60, %v62
    %v73 = vsel %vm71, %v62, %v64
    %v74 = vsel %vm71, %v66, %v68
    %v75 = vsel %vm71, %v68, %v70
    %v80 = vsel %vm51, %v72, 0.0
    %v81 = vsel %vm52, %v73, 0.0
    %v82 = vsel %vm51, %v74, 0.0
    %v83 = vsel %vm52, %v75, 0.0
    %v84 = vsel %vm35, 1, 0
    %v85 = vsel %vm36, 1, 0
    %vm86 = vcmp.eq.s32.totalorder %v84, 1
    %vm87 = vcmp.eq.s32.totalorder %v85, 1
    %88 = vrot.lane.b32.xlu0 %v45, 15
    %v89 = vpop.permute.xlu0 %88
    %90 = vrot.lane.b32.xlu0 %v57, 15
    %v91 = vpop.permute.xlu0 %90
    %92 = vrot.lane.b32.xlu0 %v46, 15
    %v93 = vpop.permute.xlu0 %92
    %94 = vrot.lane.b32.xlu0 %v47, 15
    %v95 = vpop.permute.xlu0 %94
    %96 = vrot.lane.b32.xlu0 %v58, 15
    %v97 = vpop.permute.xlu0 %96
    %98 = vrot.lane.b32.xlu0 %v48, 15
    %v99 = vpop.permute.xlu0 %98
    %vm100 = vcmask 121856
    %v101 = vsel %vm100, %v89, %v91
    %v102 = vsel %vm100, %v91, %v93
    %v103 = vsel %vm100, %v95, %v97
    %v104 = vsel %vm100, %v97, %v99
    %v109 = vsel %vm86, %v101, 0.0
    %v110 = vsel %vm87, %v102, 0.0
    %v111 = vsel %vm86, %v103, 0.0
    %v112 = vsel %vm87, %v104, 0.0
    %113 = vrot.lane.b32.xlu0 %v45, 1
    %v114 = vpop.permute.xlu0 %113
    %115 = vrot.lane.b32.xlu0 %v57, 1
    %v116 = vpop.permute.xlu0 %115
    %117 = vrot.lane.b32.xlu0 %v46, 1
    %v118 = vpop.permute.xlu0 %117
    %119 = vrot.lane.b32.xlu0 %v47, 1
    %v120 = vpop.permute.xlu0 %119
    %121 = vrot.lane.b32.xlu0 %v58, 1
    %v122 = vpop.permute.xlu0 %121
    %123 = vrot.lane.b32.xlu0 %v48, 1
    %v124 = vpop.permute.xlu0 %123
    %vm125 = vcmask 7168
    %v126 = vsel %vm125, %v114, %v116
    %v127 = vsel %vm125, %v116, %v118
    %v128 = vsel %vm125, %v120, %v122
    %v129 = vsel %vm125, %v122, %v124
    %v134 = vsel %vm51, %v126, 0.0
    %v135 = vsel %vm52, %v127, 0.0
    %v136 = vsel %vm51, %v128, 0.0
    %v137 = vsel %vm52, %v129, 0.0
    %v138 = vld [vmem:[#allocation2 + $0x4] sm:$0xff]
    %v139 = vld [vmem:[#allocation2 + $0x14] sm:$0xff]
    %v140 = vld [vmem:[#allocation2 + $0x4] sm:$0xff]
    %v141 = vld [vmem:[#allocation2 + $0xc] sm:$0xf]
    %v142 = vld [vmem:[#allocation2 + $0x14] sm:$0xff]
    %v143 = vld [vmem:[#allocation2 + $0x1c] sm:$0xf]
    %v148 = vcombine.high %v140, %v140
    %v149 = vcombine.high %v142, %v142
    %150 = vrot.lane.b32.xlu0 %v140, 127
    %v151 = vpop.permute.xlu0 %150
    %152 = vrot.lane.b32.xlu0 %v148, 127
    %v153 = vpop.permute.xlu0 %152
    %154 = vrot.lane.b32.xlu0 %v141, 127
    %v155 = vpop.permute.xlu0 %154
    %156 = vrot.lane.b32.xlu0 %v142, 127
    %v157 = vpop.permute.xlu0 %156
    %158 = vrot.lane.b32.xlu0 %v149, 127
    %v159 = vpop.permute.xlu0 %158
    %160 = vrot.lane.b32.xlu0 %v143, 127
    %v161 = vpop.permute.xlu0 %160
    %vm162 = vcmask 1039360
    %v163 = vsel %vm162, %v151, %v153
    %v164 = vsel %vm162, %v153, %v155
    %v165 = vsel %vm162, %v157, %v159
    %v166 = vsel %vm162, %v159, %v161
    %v171 = vsel %vm86, %v163, 0.0
    %v172 = vsel %vm87, %v164, 0.0
    %v173 = vsel %vm86, %v165, 0.0
    %v174 = vsel %vm87, %v166, 0.0
    %175 = vrot.lane.b32.xlu0 %v140, 113
    %v176 = vpop.permute.xlu0 %175
    %177 = vrot.lane.b32.xlu0 %v148, 113
    %v178 = vpop.permute.xlu0 %177
    %179 = vrot.lane.b32.xlu0 %v141, 113
    %v180 = vpop.permute.xlu0 %179
    %181 = vrot.lane.b32.xlu0 %v142, 113
    %v182 = vpop.permute.xlu0 %181
    %183 = vrot.lane.b32.xlu0 %v149, 113
    %v184 = vpop.permute.xlu0 %183
    %185 = vrot.lane.b32.xlu0 %v143, 113
    %v186 = vpop.permute.xlu0 %185
    %vm187 = vcmask 924672
    %v188 = vsel %vm187, %v176, %v178
    %v189 = vsel %vm187, %v178, %v180
    %v190 = vsel %vm187, %v182, %v184
    %v191 = vsel %vm187, %v184, %v186
    %v196 = vsel %vm51, %v188, 0.0
    %v197 = vsel %vm52, %v189, 0.0
    %v198 = vsel %vm51, %v190, 0.0
    %v199 = vsel %vm52, %v191, 0.0
    %200 = vrot.lane.b32.xlu0 %v140, 111
    %v201 = vpop.permute.xlu0 %200
    %202 = vrot.lane.b32.xlu0 %v148, 111
    %v203 = vpop.permute.xlu0 %202
    %204 = vrot.lane.b32.xlu0 %v141, 111
    %v205 = vpop.permute.xlu0 %204
    %206 = vrot.lane.b32.xlu0 %v142, 111
    %v207 = vpop.permute.xlu0 %206
    %208 = vrot.lane.b32.xlu0 %v149, 111
    %v209 = vpop.permute.xlu0 %208
    %210 = vrot.lane.b32.xlu0 %v143, 111
    %v211 = vpop.permute.xlu0 %210
    %vm212 = vcmask 908288
    %v213 = vsel %vm212, %v201, %v203
    %v214 = vsel %vm212, %v203, %v205
    %v215 = vsel %vm212, %v207, %v209
    %v216 = vsel %vm212, %v209, %v211
    %v221 = vsel %vm86, %v213, 0.0
    %v222 = vsel %vm87, %v214, 0.0
    %v223 = vsel %vm86, %v215, 0.0
    %v224 = vsel %vm87, %v216, 0.0
    %225 = vrot.lane.b32.xlu0 %v45, 16
    %v226 = vpop.permute.xlu0 %225
    %227 = vrot.lane.b32.xlu0 %v57, 16
    %v228 = vpop.permute.xlu0 %227
    %229 = vrot.lane.b32.xlu0 %v46, 16
    %v230 = vpop.permute.xlu0 %229
    %231 = vrot.lane.b32.xlu0 %v47, 16
    %v232 = vpop.permute.xlu0 %231
    %233 = vrot.lane.b32.xlu0 %v58, 16
    %v234 = vpop.permute.xlu0 %233
    %235 = vrot.lane.b32.xlu0 %v48, 16
    %v236 = vpop.permute.xlu0 %235
    %vm237 = vcmask 130048
    %v238 = vsel %vm237, %v226, %v228
    %v239 = vsel %vm237, %v228, %v230
    %v240 = vsel %vm237, %v232, %v234
    %v241 = vsel %vm237, %v234, %v236
    %v244 = vcombine.high %v138, %v138
    %v245 = vcombine.high %v139, %v139
    %246 = vrot.lane.b32.xlu0 %v140, 112
    %v247 = vpop.permute.xlu0 %246
    %248 = vrot.lane.b32.xlu0 %v148, 112
    %v249 = vpop.permute.xlu0 %248
    %250 = vrot.lane.b32.xlu0 %v141, 112
    %v251 = vpop.permute.xlu0 %250
    %252 = vrot.lane.b32.xlu0 %v142, 112
    %v253 = vpop.permute.xlu0 %252
    %254 = vrot.lane.b32.xlu0 %v149, 112
    %v255 = vpop.permute.xlu0 %254
    %256 = vrot.lane.b32.xlu0 %v143, 112
    %v257 = vpop.permute.xlu0 %256
    %vm258 = vcmask 916480
    %v259 = vsel %vm258, %v247, %v249
    %v260 = vsel %vm258, %v249, %v251
    %v261 = vsel %vm258, %v253, %v255
    %v262 = vsel %vm258, %v255, %v257
    %v263 = vld [vmem:[%s1] sm:$0xf]
    %v276 = vcombine.low %v80, %v81
    %v277 = vcombine.low %v238, %v239
    %v278 = vcombine.low %v109, %v110
    %v279 = vcombine.low %v134, %v135
    %v280 = vcombine.low %v138, %v244
    %v281 = vcombine.low %v171, %v172
    %v282 = vcombine.low %v196, %v197
    %v283 = vcombine.low %v259, %v260
    %v284 = vcombine.low %v221, %v222
    %v286 = vcombine.low %v276, %v277
    %v287 = vcombine.high %v276, %v277
    %v288 = vcombine.low %v278, %v279
    %v289 = vcombine.high %v278, %v279
    %v290 = vcombine.low %v280, %v281
    %v291 = vcombine.high %v280, %v281
    %v292 = vcombine.low %v282, %v283
    %v293 = vcombine.high %v282, %v283
    %v294 = vcombine.high %v284, %v284
    %v304 = vpack.c.bf16 %v288, %v286
    %v305 = vpack.c.bf16 %v289, %v287
    %v306 = vpack.c.bf16 %v292, %v290
    %v307 = vpack.c.bf16 %v293, %v291
    %v308 = vpack.c.bf16 %v284, %v284
    %v309 = vpack.c.bf16 %v294, %v294
    %vm310 = vcmask 293888
    %v312 = vsel %vm310, %v263, 0
    %vm314 = vcmask 1041408
    %v316 = vsel %vm314, %v308, 0
    %v319 = vsel %vm314, %v309, 0
    %321 = vmatprep.subr.bf16.mxu0 0
    %322 = vmatpush1.bf16.msra.mxu0 0
    %323 = vmatprep.subr.bf16.mxu0 0
    %324 = vmatpush1.bf16.msra.mxu0 0
    %325 = vmatprep.subr.bf16.mxu0 0
    %326 = vmatpush1.bf16.msra.mxu0 0
    %327 = vmatprep.subr.bf16.mxu0 0
    %328 = vmatpush1.bf16.msra.mxu0 0
    %329 = vmatprep.subr.bf16.mxu0 0
    %330 = vmatpush1.bf16.msra.mxu0 0
    %331 = vmatprep.subr.bf16.mxu0 %v319
    %332 = vmatpush1.bf16.msra.mxu0 %v316
    %333 = vmatprep.subr.bf16.mxu0 %v307
    %334 = vmatpush1.bf16.msra.mxu0 %v306
    %335 = vmatprep.subr.bf16.mxu0 %v305
    %336 = vmatpush1.bf16.msra.mxu0 %v304
    %337 = vmatprep.subr.bf16.mxu0 0
    %338 = vmatpush2.bf16.msra.mxu0 0
    %339 = vmatprep.subr.bf16.mxu0 0
    %340 = vmatpush2.bf16.msra.mxu0 0
    %341 = vmatprep.subr.bf16.mxu0 0
    %342 = vmatpush2.bf16.msra.mxu0 0
    %343 = vmatprep.subr.bf16.mxu0 0
    %344 = vmatpush2.bf16.msra.mxu0 0
    %345 = vmatprep.subr.bf16.mxu0 0
    %346 = vmatpush2.bf16.msra.mxu0 0
    %347 = vmatprep.subr.bf16.mxu0 0
    %348 = vmatpush2.bf16.msra.mxu0 0
    %349 = vmatprep.subr.bf16.mxu0 0
    %350 = vmatpush2.bf16.msra.mxu0 0
    %351 = vmatprep.subr.bf16.mxu0 0
    %352 = vmatpush2.bf16.msra.mxu0 0
    %353 = vmatprep.mubr.bf16.mxu0 0
    %354 = vmatmul.mubr.bf16.gmra.mxu0 %v312
    %v355 = vpop.f32.mrf.mxu0
    %v356 = vadd.f32 0.0, %v355
    %v357 = vpop.f32.mrf.mxu0
    %v358 = vadd.f32 0.0, %v357
    %v359 = vpop.f32.mrf.mxu0
    %v360 = vpop.f32.mrf.mxu0
    %361 = vdwg.mxu0
    %v374 = vcombine.low %v82, %v83
    %v375 = vcombine.low %v240, %v241
    %v376 = vcombine.low %v111, %v112
    %v377 = vcombine.low %v136, %v137
    %v378 = vcombine.low %v139, %v245
    %v379 = vcombine.low %v173, %v174
    %v380 = vcombine.low %v198, %v199
    %v381 = vcombine.low %v261, %v262
    %v382 = vcombine.low %v223, %v224
    %v384 = vcombine.low %v374, %v375
    %v385 = vcombine.high %v374, %v375
    %v386 = vcombine.low %v376, %v377
    %v387 = vcombine.high %v376, %v377
    %v388 = vcombine.low %v378, %v379
    %v389 = vcombine.high %v378, %v379
    %v390 = vcombine.low %v380, %v381
    %v391 = vcombine.high %v380, %v381
    %v392 = vcombine.high %v382, %v382
    %v402 = vpack.c.bf16 %v386, %v384
    %v403 = vpack.c.bf16 %v387, %v385
    %v404 = vpack.c.bf16 %v390, %v388
    %v405 = vpack.c.bf16 %v391, %v389
    %v406 = vpack.c.bf16 %v382, %v382
    %v407 = vpack.c.bf16 %v392, %v392
    %v409 = vsel %vm314, %v406, 0
    %v412 = vsel %vm314, %v407, 0
    %414 = vmatprep.subr.bf16.mxu0 0
    %415 = vmatpush1.bf16.msra.mxu0 0
    %416 = vmatprep.subr.bf16.mxu0 0
    %417 = vmatpush1.bf16.msra.mxu0 0
    %418 = vmatprep.subr.bf16.mxu0 0
    %419 = vmatpush1.bf16.msra.mxu0 0
    %420 = vmatprep.subr.bf16.mxu0 0
    %421 = vmatpush1.bf16.msra.mxu0 0
    %422 = vmatprep.subr.bf16.mxu0 0
    %423 = vmatpush1.bf16.msra.mxu0 0
    %424 = vmatprep.subr.bf16.mxu0 %v412
    %425 = vmatpush1.bf16.msra.mxu0 %v409
    %426 = vmatprep.subr.bf16.mxu0 %v405
    %427 = vmatpush1.bf16.msra.mxu0 %v404
    %428 = vmatprep.subr.bf16.mxu0 %v403
    %429 = vmatpush1.bf16.msra.mxu0 %v402
    %430 = vmatprep.subr.bf16.mxu0 0
    %431 = vmatpush2.bf16.msra.mxu0 0
    %432 = vmatprep.subr.bf16.mxu0 0
    %433 = vmatpush2.bf16.msra.mxu0 0
    %434 = vmatprep.subr.bf16.mxu0 0
    %435 = vmatpush2.bf16.msra.mxu0 0
    %436 = vmatprep.subr.bf16.mxu0 0
    %437 = vmatpush2.bf16.msra.mxu0 0
    %438 = vmatprep.subr.bf16.mxu0 0
    %439 = vmatpush2.bf16.msra.mxu0 0
    %440 = vmatprep.subr.bf16.mxu0 0
    %441 = vmatpush2.bf16.msra.mxu0 0
    %442 = vmatprep.subr.bf16.mxu0 0
    %443 = vmatpush2.bf16.msra.mxu0 0
    %444 = vmatprep.subr.bf16.mxu0 0
    %445 = vmatpush2.bf16.msra.mxu0 0
    %446 = vmatprep.mubr.bf16.mxu0 0
    %447 = vmatmul.mubr.bf16.gmra.mxu0 %v312
    %v448 = vpop.f32.mrf.mxu0
    %v449 = vadd.f32 0.0, %v448
    %v450 = vpop.f32.mrf.mxu0
    %v451 = vadd.f32 0.0, %v450
    %v452 = vpop.f32.mrf.mxu0
    %v453 = vpop.f32.mrf.mxu0
    %454 = vdwg.mxu0
    %v455 = vld [vmem:[%s2] sm:$0xff]
    %v456 = vld [vmem:[%s3] sm:$0xff]
    %v457 = vadd.f32 %v356, %v358
    %458 = vadd.xlane.f32.xlu0 %v457
    %v459 = vpop.xlane.xlu0 %458
    %v460 = vadd.f32 %v449, %v451
    %461 = vadd.xlane.f32.xlu0 %v460
    %v462 = vpop.xlane.xlu0 %461
    %v463 = vadd.f32 %v459, %v462
    %v464 = vmul.f32 %v356, %v356
    %v465 = vmul.f32 %v358, %v358
    %v466 = vmul.f32 %v449, %v449
    %v467 = vmul.f32 %v451, %v451
    %v468 = vadd.f32 %v464, %v465
    %469 = vadd.xlane.f32.xlu0 %v468
    %v470 = vpop.xlane.xlu0 %469
    %v471 = vadd.f32 %v466, %v467
    %472 = vadd.xlane.f32.xlu0 %v471
    %v473 = vpop.xlane.xlu0 %472
    %v474 = vadd.f32 %v470, %v473
    %v475 = vmul.f32 %v463, 0.001953125
    %v476 = vmul.f32 %v474, 0.001953125
    %v477 = vmul.f32 %v475, %v475
    %v478 = vsub.f32 %v476, %v477
    %v479 = vadd.f32 %v478, 1e-05
    %v480 = vrsqrt.pop %v479
    %v481 = vmul.f32 %v455, %v480
    %v482 = vmul.f32 %v475, %v481
    %v483 = vsub.f32 %v456, %v482
    %485 = vset.pattern.permute.xlu0 0
    %486 = vperm.xlu0 %485, %v481
    %v487 = vpop.permute.xlu0 %486
    %v489 = vmul.f32 %v356, %v487
    %v490 = vmul.f32 %v358, %v487
    %v491 = vmul.f32 %v449, %v487
    %v492 = vmul.f32 %v451, %v487
    %494 = vset.pattern.permute.xlu0 0
    %495 = vperm.xlu0 %494, %v483
    %v496 = vpop.permute.xlu0 %495
    %v498 = vadd.f32 %v489, %v496
    %v499 = vadd.f32 %v490, %v496
    %v500 = vadd.f32 %v491, %v496
    %v501 = vadd.f32 %v492, %v496
    %v502 = vmax.f32 %v498, 0.0
    %v503 = vmax.f32 %v499, 0.0
    %v504 = vmax.f32 %v500, 0.0
    %v505 = vmax.f32 %v501, 0.0
    %506 = vst [vmem:[#allocation3] sm:$0xff] 0.0
    %507 = vst [vmem:[#allocation3 + $0x20] sm:$0xff] 0.0
    %508 = vst [vmem:[#allocation3 + $0x18] sm:$0xff] 0.0
    %509 = vst [vmem:[#allocation3 + $0x38] sm:$0xff] 0.0
    %510 = vst [vmem:[#allocation3 + $0x8] sm:$0xff] %v502
    %511 = vst [vmem:[#allocation3 + $0x10] sm:$0xff] %v503
    %512 = vst [vmem:[#allocation3 + $0x28] sm:$0xff] %v504
    %513 = vst [vmem:[#allocation3 + $0x30] sm:$0xff] %v505
    %v514 = vld [vmem:[#allocation3] sm:$0xff]
    %v515 = vld [vmem:[#allocation3 + $0x8] sm:$0xff]
    %v516 = vld [vmem:[#allocation3 + $0x10] sm:$0xff]
    %v517 = vld [vmem:[#allocation3 + $0x20] sm:$0xff]
    %v518 = vld [vmem:[#allocation3 + $0x28] sm:$0xff]
    %v519 = vld [vmem:[#allocation3 + $0x30] sm:$0xff]
    %526 = vrot.lane.b32.xlu0 %v514, 17
    %v527 = vpop.permute.xlu0 %526
    %528 = vrot.lane.b32.xlu0 %v515, 17
    %v529 = vpop.permute.xlu0 %528
    %530 = vrot.lane.b32.xlu0 %v516, 17
    %v531 = vpop.permute.xlu0 %530
    %532 = vrot.lane.b32.xlu0 %v517, 17
    %v533 = vpop.permute.xlu0 %532
    %534 = vrot.lane.b32.xlu0 %v518, 17
    %v535 = vpop.permute.xlu0 %534
    %536 = vrot.lane.b32.xlu0 %v519, 17
    %v537 = vpop.permute.xlu0 %536
    %v538 = vsel %vm71, %v527, %v529
    %v539 = vsel %vm71, %v529, %v531
    %v540 = vsel %vm71, %v533, %v535
    %v541 = vsel %vm71, %v535, %v537
    %v546 = vsel %vm51, %v538, 0.0
    %v547 = vsel %vm52, %v539, 0.0
    %v548 = vsel %vm51, %v540, 0.0
    %v549 = vsel %vm52, %v541, 0.0
    %550 = vrot.lane.b32.xlu0 %v514, 15
    %v551 = vpop.permute.xlu0 %550
    %552 = vrot.lane.b32.xlu0 %v515, 15
    %v553 = vpop.permute.xlu0 %552
    %554 = vrot.lane.b32.xlu0 %v516, 15
    %v555 = vpop.permute.xlu0 %554
    %556 = vrot.lane.b32.xlu0 %v517, 15
    %v557 = vpop.permute.xlu0 %556
    %558 = vrot.lane.b32.xlu0 %v518, 15
    %v559 = vpop.permute.xlu0 %558
    %560 = vrot.lane.b32.xlu0 %v519, 15
    %v561 = vpop.permute.xlu0 %560
    %v562 = vsel %vm100, %v551, %v553
    %v563 = vsel %vm100, %v553, %v555
    %v564 = vsel %vm100, %v557, %v559
    %v565 = vsel %vm100, %v559, %v561
    %v570 = vsel %vm86, %v562, 0.0
    %v571 = vsel %vm87, %v563, 0.0
    %v572 = vsel %vm86, %v564, 0.0
    %v573 = vsel %vm87, %v565, 0.0
    %574 = vrot.lane.b32.xlu0 %v514, 1
    %v575 = vpop.permute.xlu0 %574
    %576 = vrot.lane.b32.xlu0 %v515, 1
    %v577 = vpop.permute.xlu0 %576
    %578 = vrot.lane.b32.xlu0 %v516, 1
    %v579 = vpop.permute.xlu0 %578
    %580 = vrot.lane.b32.xlu0 %v517, 1
    %v581 = vpop.permute.xlu0 %580
    %582 = vrot.lane.b32.xlu0 %v518, 1
    %v583 = vpop.permute.xlu0 %582
    %584 = vrot.lane.b32.xlu0 %v519, 1
    %v585 = vpop.permute.xlu0 %584
    %v586 = vsel %vm125, %v575, %v577
    %v587 = vsel %vm125, %v577, %v579
    %v588 = vsel %vm125, %v581, %v583
    %v589 = vsel %vm125, %v583, %v585
    %v594 = vsel %vm51, %v586, 0.0
    %v595 = vsel %vm52, %v587, 0.0
    %v596 = vsel %vm51, %v588, 0.0
    %v597 = vsel %vm52, %v589, 0.0
    %v598 = vld [vmem:[#allocation3 + $0x8] sm:$0xff]
    %v599 = vld [vmem:[#allocation3 + $0x10] sm:$0xff]
    %v600 = vld [vmem:[#allocation3 + $0x18] sm:$0xff]
    %v601 = vld [vmem:[#allocation3 + $0x28] sm:$0xff]
    %v602 = vld [vmem:[#allocation3 + $0x30] sm:$0xff]
    %v603 = vld [vmem:[#allocation3 + $0x38] sm:$0xff]
    %610 = vrot.lane.b32.xlu0 %v598, 127
    %v611 = vpop.permute.xlu0 %610
    %612 = vrot.lane.b32.xlu0 %v599, 127
    %v613 = vpop.permute.xlu0 %612
    %614 = vrot.lane.b32.xlu0 %v600, 127
    %v615 = vpop.permute.xlu0 %614
    %616 = vrot.lane.b32.xlu0 %v601, 127
    %v617 = vpop.permute.xlu0 %616
    %618 = vrot.lane.b32.xlu0 %v602, 127
    %v619 = vpop.permute.xlu0 %618
    %620 = vrot.lane.b32.xlu0 %v603, 127
    %v621 = vpop.permute.xlu0 %620
    %v622 = vsel %vm162, %v611, %v613
    %v623 = vsel %vm162, %v613, %v615
    %v624 = vsel %vm162, %v617, %v619
    %v625 = vsel %vm162, %v619, %v621
    %v630 = vsel %vm86, %v622, 0.0
    %v631 = vsel %vm87, %v623, 0.0
    %v632 = vsel %vm86, %v624, 0.0
    %v633 = vsel %vm87, %v625, 0.0
    %634 = vrot.lane.b32.xlu0 %v598, 113
    %v635 = vpop.permute.xlu0 %634
    %636 = vrot.lane.b32.xlu0 %v599, 113
    %v637 = vpop.permute.xlu0 %636
    %638 = vrot.lane.b32.xlu0 %v600, 113
    %v639 = vpop.permute.xlu0 %638
    %640 = vrot.lane.b32.xlu0 %v601, 113
    %v641 = vpop.permute.xlu0 %640
    %642 = vrot.lane.b32.xlu0 %v602, 113
    %v643 = vpop.permute.xlu0 %642
    %644 = vrot.lane.b32.xlu0 %v603, 113
    %v645 = vpop.permute.xlu0 %644
    %v646 = vsel %vm187, %v635, %v637
    %v647 = vsel %vm187, %v637, %v639
    %v648 = vsel %vm187, %v641, %v643
    %v649 = vsel %vm187, %v643, %v645
    %v654 = vsel %vm51, %v646, 0.0
    %v655 = vsel %vm52, %v647, 0.0
    %v656 = vsel %vm51, %v648, 0.0
    %v657 = vsel %vm52, %v649, 0.0
    %658 = vrot.lane.b32.xlu0 %v598, 111
    %v659 = vpop.permute.xlu0 %658
    %660 = vrot.lane.b32.xlu0 %v599, 111
    %v661 = vpop.permute.xlu0 %660
    %662 = vrot.lane.b32.xlu0 %v600, 111
    %v663 = vpop.permute.xlu0 %662
    %664 = vrot.lane.b32.xlu0 %v601, 111
    %v665 = vpop.permute.xlu0 %664
    %666 = vrot.lane.b32.xlu0 %v602, 111
    %v667 = vpop.permute.xlu0 %666
    %668 = vrot.lane.b32.xlu0 %v603, 111
    %v669 = vpop.permute.xlu0 %668
    %v670 = vsel %vm212, %v659, %v661
    %v671 = vsel %vm212, %v661, %v663
    %v672 = vsel %vm212, %v665, %v667
    %v673 = vsel %vm212, %v667, %v669
    %v678 = vsel %vm86, %v670, 0.0
    %v679 = vsel %vm87, %v671, 0.0
    %v680 = vsel %vm86, %v672, 0.0
    %v681 = vsel %vm87, %v673, 0.0
    %682 = vrot.lane.b32.xlu0 %v514, 16
    %v683 = vpop.permute.xlu0 %682
    %684 = vrot.lane.b32.xlu0 %v515, 16
    %v685 = vpop.permute.xlu0 %684
    %686 = vrot.lane.b32.xlu0 %v516, 16
    %v687 = vpop.permute.xlu0 %686
    %688 = vrot.lane.b32.xlu0 %v517, 16
    %v689 = vpop.permute.xlu0 %688
    %690 = vrot.lane.b32.xlu0 %v518, 16
    %v691 = vpop.permute.xlu0 %690
    %692 = vrot.lane.b32.xlu0 %v519, 16
    %v693 = vpop.permute.xlu0 %692
    %v694 = vsel %vm237, %v683, %v685
    %v695 = vsel %vm237, %v685, %v687
    %v696 = vsel %vm237, %v689, %v691
    %v697 = vsel %vm237, %v691, %v693
    %702 = vrot.lane.b32.xlu0 %v598, 112
    %v703 = vpop.permute.xlu0 %702
    %704 = vrot.lane.b32.xlu0 %v599, 112
    %v705 = vpop.permute.xlu0 %704
    %706 = vrot.lane.b32.xlu0 %v600, 112
    %v707 = vpop.permute.xlu0 %706
    %708 = vrot.lane.b32.xlu0 %v601, 112
    %v709 = vpop.permute.xlu0 %708
    %710 = vrot.lane.b32.xlu0 %v602, 112
    %v711 = vpop.permute.xlu0 %710
    %712 = vrot.lane.b32.xlu0 %v603, 112
    %v713 = vpop.permute.xlu0 %712
    %v714 = vsel %vm258, %v703, %v705
    %v715 = vsel %vm258, %v705, %v707
    %v716 = vsel %vm258, %v709, %v711
    %v717 = vsel %vm258, %v711, %v713
    %v722 = vld [vmem:[%s4] sm:$0xf]
    %v723 = vpack.c.bf16 %v694, %v546
    %v724 = vpack.c.bf16 %v695, %v547
    %v725 = vpack.c.bf16 %v594, %v570
    %v726 = vpack.c.bf16 %v595, %v571
    %v727 = vpack.c.bf16 %v630, %v515
    %v728 = vpack.c.bf16 %v631, %v516
    %v729 = vpack.c.bf16 %v714, %v654
    %v730 = vpack.c.bf16 %v715, %v655
    %v731 = vpack.c.bf16 %v678, %v678
    %v732 = vpack.c.bf16 %v679, %v679
    %vm733 = vcmask 588800
    %v735 = vsel %vm733, %v722, 0
    %vm737 = vcmask 1043456
    %v739 = vsel %vm737, %v731, 0
    %v742 = vsel %vm737, %v732, 0
    %744 = vmatprep.subr.bf16.mxu0 0
    %745 = vmatpush1.bf16.msra.mxu0 0
    %746 = vmatprep.subr.bf16.mxu0 0
    %747 = vmatpush1.bf16.msra.mxu0 0
    %748 = vmatprep.subr.bf16.mxu0 0
    %749 = vmatpush1.bf16.msra.mxu0 0
    %750 = vmatprep.subr.bf16.mxu0 %v742
    %751 = vmatpush1.bf16.msra.mxu0 %v739
    %752 = vmatprep.subr.bf16.mxu0 %v730
    %753 = vmatpush1.bf16.msra.mxu0 %v729
    %754 = vmatprep.subr.bf16.mxu0 %v728
    %755 = vmatpush1.bf16.msra.mxu0 %v727
    %756 = vmatprep.subr.bf16.mxu0 %v726
    %757 = vmatpush1.bf16.msra.mxu0 %v725
    %758 = vmatprep.subr.bf16.mxu0 %v724
    %759 = vmatpush1.bf16.msra.mxu0 %v723
    %760 = vmatprep.subr.bf16.mxu0 0
    %761 = vmatpush2.bf16.msra.mxu0 0
    %762 = vmatprep.subr.bf16.mxu0 0
    %763 = vmatpush2.bf16.msra.mxu0 0
    %764 = vmatprep.subr.bf16.mxu0 0
    %765 = vmatpush2.bf16.msra.mxu0 0
    %766 = vmatprep.subr.bf16.mxu0 0
    %767 = vmatpush2.bf16.msra.mxu0 0
    %768 = vmatprep.subr.bf16.mxu0 0
    %769 = vmatpush2.bf16.msra.mxu0 0
    %770 = vmatprep.subr.bf16.mxu0 0
    %771 = vmatpush2.bf16.msra.mxu0 0
    %772 = vmatprep.subr.bf16.mxu0 0
    %773 = vmatpush2.bf16.msra.mxu0 0
    %774 = vmatprep.subr.bf16.mxu0 0
    %775 = vmatpush2.bf16.msra.mxu0 0
    %776 = vmatprep.mubr.bf16.mxu0 0
    %777 = vmatmul.mubr.bf16.gmra.mxu0 %v735
    %v778 = vpop.f32.mrf.mxu0
    %v779 = vadd.f32 0.0, %v778
    %v780 = vpop.f32.mrf.mxu0
    %v781 = vadd.f32 0.0, %v780
    %v782 = vpop.f32.mrf.mxu0
    %v783 = vpop.f32.mrf.mxu0
    %784 = vdwg.mxu0
    %v785 = vpack.c.bf16 %v696, %v548
    %v786 = vpack.c.bf16 %v697, %v549
    %v787 = vpack.c.bf16 %v596, %v572
    %v788 = vpack.c.bf16 %v597, %v573
    %v789 = vpack.c.bf16 %v632, %v518
    %v790 = vpack.c.bf16 %v633, %v519
    %v791 = vpack.c.bf16 %v716, %v656
    %v792 = vpack.c.bf16 %v717, %v657
    %v793 = vpack.c.bf16 %v680, %v680
    %v794 = vpack.c.bf16 %v681, %v681
    %v796 = vsel %vm737, %v793, 0
    %v799 = vsel %vm737, %v794, 0
    %801 = vmatprep.subr.bf16.mxu0 0
    %802 = vmatpush1.bf16.msra.mxu0 0
    %803 = vmatprep.subr.bf16.mxu0 0
    %804 = vmatpush1.bf16.msra.mxu0 0
    %805 = vmatprep.subr.bf16.mxu0 0
    %806 = vmatpush1.bf16.msra.mxu0 0
    %807 = vmatprep.subr.bf16.mxu0 %v799
    %808 = vmatpush1.bf16.msra.mxu0 %v796
    %809 = vmatprep.subr.bf16.mxu0 %v792
    %810 = vmatpush1.bf16.msra.mxu0 %v791
    %811 = vmatprep.subr.bf16.mxu0 %v790
    %812 = vmatpush1.bf16.msra.mxu0 %v789
    %813 = vmatprep.subr.bf16.mxu0 %v788
    %814 = vmatpush1.bf16.msra.mxu0 %v787
    %815 = vmatprep.subr.bf16.mxu0 %v786
    %816 = vmatpush1.bf16.msra.mxu0 %v785
    %817 = vmatprep.subr.bf16.mxu0 0
    %818 = vmatpush2.bf16.msra.mxu0 0
    %819 = vmatprep.subr.bf16.mxu0 0
    %820 = vmatpush2.bf16.msra.mxu0 0
    %821 = vmatprep.subr.bf16.mxu0 0
    %822 = vmatpush2.bf16.msra.mxu0 0
    %823 = vmatprep.subr.bf16.mxu0 0
    %824 = vmatpush2.bf16.msra.mxu0 0
    %825 = vmatprep.subr.bf16.mxu0 0
    %826 = vmatpush2.bf16.msra.mxu0 0
    %827 = vmatprep.subr.bf16.mxu0 0
    %828 = vmatpush2.bf16.msra.mxu0 0
    %829 = vmatprep.subr.bf16.mxu0 0
    %830 = vmatpush2.bf16.msra.mxu0 0
    %831 = vmatprep.subr.bf16.mxu0 0
    %832 = vmatpush2.bf16.msra.mxu0 0
    %833 = vmatprep.mubr.bf16.mxu0 0
    %834 = vmatmul.mubr.bf16.gmra.mxu0 %v735
    %v835 = vpop.f32.mrf.mxu0
    %v836 = vadd.f32 0.0, %v835
    %v837 = vpop.f32.mrf.mxu0
    %v838 = vadd.f32 0.0, %v837
    %v839 = vpop.f32.mrf.mxu0
    %v840 = vpop.f32.mrf.mxu0
    %841 = vdwg.mxu0
    %v842 = vld [vmem:[%s5] sm:$0xff]
    %v843 = vld [vmem:[%s6] sm:$0xff]
    %v844 = vadd.f32 %v779, %v781
    %845 = vadd.xlane.f32.xlu0 %v844
    %v846 = vpop.xlane.xlu0 %845
    %v847 = vadd.f32 %v836, %v838
    %848 = vadd.xlane.f32.xlu0 %v847
    %v849 = vpop.xlane.xlu0 %848
    %v850 = vadd.f32 %v846, %v849
    %v851 = vmul.f32 %v779, %v779
    %v852 = vmul.f32 %v781, %v781
    %v853 = vmul.f32 %v836, %v836
    %v854 = vmul.f32 %v838, %v838
    %v855 = vadd.f32 %v851, %v852
    %856 = vadd.xlane.f32.xlu0 %v855
    %v857 = vpop.xlane.xlu0 %856
    %v858 = vadd.f32 %v853, %v854
    %859 = vadd.xlane.f32.xlu0 %v858
    %v860 = vpop.xlane.xlu0 %859
    %v861 = vadd.f32 %v857, %v860
    %v862 = vmul.f32 %v850, 0.001953125
    %v863 = vmul.f32 %v861, 0.001953125
    %v864 = vmul.f32 %v862, %v862
    %v865 = vsub.f32 %v863, %v864
    %v866 = vadd.f32 %v865, 1e-05
    %v867 = vrsqrt.pop %v866
    %v868 = vmul.f32 %v842, %v867
    %v869 = vmul.f32 %v862, %v868
    %v870 = vsub.f32 %v843, %v869
    %872 = vset.pattern.permute.xlu0 0
    %873 = vperm.xlu0 %872, %v868
    %v874 = vpop.permute.xlu0 %873
    %v876 = vmul.f32 %v779, %v874
    %v877 = vmul.f32 %v781, %v874
    %v878 = vmul.f32 %v836, %v874
    %v879 = vmul.f32 %v838, %v874
    %881 = vset.pattern.permute.xlu0 0
    %882 = vperm.xlu0 %881, %v870
    %v883 = vpop.permute.xlu0 %882
    %v885 = vadd.f32 %v876, %v883
    %v886 = vadd.f32 %v877, %v883
    %v887 = vadd.f32 %v878, %v883
    %v888 = vadd.f32 %v879, %v883
    %v889 = vmax.f32 %v885, 0.0
    %v890 = vmax.f32 %v886, 0.0
    %v891 = vmax.f32 %v887, 0.0
    %v892 = vmax.f32 %v888, 0.0
    %893 = vst [vmem:[#allocation4] sm:$0xff] %v889
    %894 = vst [vmem:[#allocation4 + $0x8] sm:$0xff] %v890
    %895 = vst [vmem:[#allocation4 + $0x10] sm:$0xff] %v891
    %896 = vst [vmem:[#allocation4 + $0x18] sm:$0xff] %v892
    // Predicated region
    $region30: #{tpu_custom_call.1} parent=1 // pred_check
      _
    $region31: #{tpu_custom_call.1} parent=1 // pred_check_branch
      %898 = sbr.rel (0) target = $region33
    $region32: #{tpu_custom_call.1} parent=1 // pred_region
      %s900 = ssub.s32 512, 512
      %901 = vsyncadd [#allocation5], %s900
      %s902 = sshll.u32 [#allocation4], 4
      %s903 = int_to_ptr.vmem [resolvable:$true] %s902
      %908 = dma.vmem_to_hbm [thread:$0]  %s903, 512, %s7, [#allocation5], 256, 256, 16
    $region33: #{tpu_custom_call.1} parent=1 // pred_fallthru
      _
    // Predicated region
    $region34: #{tpu_custom_call.1} parent=1 // pred_check
      _
    $region35: #{tpu_custom_call.1} parent=1 // pred_check_branch
      %910 = sbr.rel (0) target = $region37
    $region36: #{tpu_custom_call.1} parent=1 // pred_region
      %911 = dma.done [#allocation5], 512
    $region37: #{tpu_custom_call.1} parent=1 // pred_fallthru
      _
    %912 = vsyncpa [#allocation5], 1

</llo_original>
